<compile_context>
chip_gen: v7x
topology: tpu7x:2x2x1
jax: 0.10.0
libtpu: 0.0.40
codegen_flags: <defaults>
</compile_context>

<pallas_src>
import functools
import math

import numpy as np
import jax
import jax.numpy as jnp
from jax.experimental import pallas as pl
from jax.experimental.pallas import tpu as pltpu


# ---------------------------------------------------------------------------
# Generation-aware budgets & tile selection
# ---------------------------------------------------------------------------
def _round_up(n, m):
    return ((n + m - 1) // m) * m


@functools.lru_cache(maxsize=None)
def _tpu_budget():
    """Returns (per-step VMEM working-set budget, vmem_limit_bytes, two_cores)."""
    vmem_phys = 64 << 20                      # conservative default (v7x-sized)
    try:
        vmem_phys = int(pltpu.get_tpu_info().vmem_capacity_bytes)
    except Exception:
        pass
    # v7x: 64 MiB / TensorCore and 2 TensorCores -> keep spare parallel grid steps
    # so batch packing does not idle the second core.  v5e/v6e: 128 MiB, 1 TC ->
    # pack batches aggressively.
    two_cores = vmem_phys <= (64 << 20)
    budget = min(vmem_phys // 4, 24 << 20)           # double-buffered working set
    vmem_limit = min(vmem_phys * 3 // 4, 96 << 20)   # explicit scoped-VMEM allowance
    return budget, vmem_limit, two_cores


def _pick_tile(n, align, cap):
    """(tile, padded_n): tile is a multiple of `align` (<= cap when possible) and
    padded_n = round_up(n, tile).  Prefers the largest tile whose zero-padding
    overhead stays under ~12.5%; no divisor-only fallback cliff."""
    n_min = _round_up(n, align)
    if n_min <= cap:
        return n_min, n_min
    budget = n_min + max(n // 8, align)
    cap_al = max(align, (cap // align) * align)
    for t in range(cap_al, align - 1, -align):
        padded = _round_up(n, t)
        if padded <= budget:
            return t, padded
    return align, n_min


# ---------------------------------------------------------------------------
# Pallas kernel: batch-packed, tiled matmul  out[b] = S~[b] @ X~[b]
# ---------------------------------------------------------------------------
def _matmul_kernel(s_ref, v_ref, o_ref, *, single_k):
    prod = jnp.einsum("bmk,bkn->bmn", s_ref[...], v_ref[...],
                      preferred_element_type=jnp.float32)
    if single_k:
        # Single K step: no init/finalize, just write the f32 result.
        o_ref[...] = prod
    else:
        # Output block is resident across the (innermost, "arbitrary") K axis:
        # accumulate in place in f32 — no VMEM acc scratch needed.
        @pl.when(pl.program_id(3) == 0)
        def _init():
            o_ref[...] = jnp.zeros_like(o_ref)

        o_ref[...] += prod


def _batched_matmul(s, v):
    """s: [B, M, K] bf16, v: [B, K, N] bf16 -> [B, M, N] f32 on the MXU."""
    B, M, K = s.shape
    N = v.shape[-1]
    budget, vmem_limit, two_cores = _tpu_budget()

    tm, Mp = _pick_tile(M, 8, 512)
    tk, Kp = _pick_tile(K, 128, 512)
    tn, Np = _pick_tile(N, 128, 512)

    # Zero-pad operands to the tiled extents: zero K rows/columns keep the product
    # exact, extra M rows / N columns are sliced off below.  Lane-dense (128)
    # blocks => unmasked vmatmul / vst, and no partial edge blocks exist.
    s = jnp.pad(s, ((0, 0), (0, Mp - M), (0, Kp - K)))
    v = jnp.pad(v, ((0, 0), (0, Kp - K), (0, Np - N)))

    # Per-batch double-buffered working set: bf16 inputs + f32 output
    # (corrected accounting — includes the output double buffer; no acc scratch).
    per_batch = 2 * (tm * tk) * 2 + 2 * (tk * tn) * 2 + 2 * (tm * tn) * 4
    grid_mn = (Mp // tm) * (Np // tn)
    min_parallel = 2 if two_cores else 1
    bblk = 1
    for cand in range(min(B, 8), 0, -1):
        if B % cand:
            continue
        if cand * per_batch > budget:
            continue
        if cand > 1 and (B // cand) * grid_mn < min_parallel:
            continue
        bblk = cand
        break

    nk = Kp // tk
    grid = (B // bblk, Mp // tm, Np // tn, nk)
    out = pl.pallas_call(
        functools.partial(_matmul_kernel, single_k=(nk == 1)),
        out_shape=jax.ShapeDtypeStruct((B, Mp, Np), jnp.float32),
        grid=grid,
        in_specs=[
            pl.BlockSpec((bblk, tm, tk), lambda b, i, j, k: (b, i, k)),
            pl.BlockSpec((bblk, tk, tn), lambda b, i, j, k: (b, k, j)),
        ],
        out_specs=pl.BlockSpec((bblk, tm, tn), lambda b, i, j, k: (b, i, j)),
        compiler_params=pltpu.CompilerParams(
            dimension_semantics=("parallel", "parallel", "parallel", "arbitrary"),
            vmem_limit_bytes=vmem_limit),
    )(s, v)
    return out[:, :M, :N]


# ---------------------------------------------------------------------------
# Wrapper: full GroupConvAttention forward
# ---------------------------------------------------------------------------
@jax.jit
def group_conv_attention(x, scores, alpha):
    """x: [B, C, H, W], scores: [B, hs*ws, hs*ws], alpha: traced scalar."""
    B, C, H, W = x.shape
    hw = scores.shape[-1]
    hs = int(round(math.sqrt(hw)))
    ws = hs
    rate = H // hs
    assert rate * hs == H and rate % 2 == 0, "rate must be an even integer (as in the torch model)"
    pad = rate // 2            # vpadding; vksize = 2*rate is folded away analytically
    hs1, ws1 = hs + 1, ws + 1

    # ReplicationPad2d + re-tile into (rate x rate) tiles (image-sized RHS):
    #   X~[b, (P,Q), (c,rh,rw)] = xp[b, c, P*rate + rh, Q*rate + rw]
    xp = jnp.pad(x, ((0, 0), (0, 0), (pad, pad), (pad, pad)), mode="edge")
    xt = xp.reshape(B, C, hs1, rate, ws1, rate).transpose(0, 2, 4, 1, 3, 5)
    xt = xt.reshape(B, hs1 * ws1, C * rate * rate).astype(jnp.bfloat16)

    # S~[b,(I,J),(P,Q)] = sum_{s,t in {0,1}} scores[b,(I-s,J-t),(P-s,Q-t)]
    # (the conv_transpose 2x2 overlap-add folded into the scores).
    s5 = scores.astype(jnp.float32).reshape(B, hs, ws, hs, ws)
    st = jnp.zeros((B, hs1, ws1, hs1, ws1), jnp.float32)
    for s in (0, 1):
        for t in (0, 1):
            st = st.at[:, s:s + hs, t:t + ws, s:s + hs, t:t + ws].add(s5)
    st = st.reshape(B, hs1 * ws1, hs1 * ws1).astype(jnp.bfloat16)

    # Hot contraction on the MXU (bf16 operands, f32 accumulate) in Pallas.
    canvas_flat = _batched_matmul(st, xt)              # [B, hs1*ws1, C*rate^2] f32

    # Epilogue: un-tile, crop (== conv_transpose padding), scale, residual.
    # Deliberately XLA: it fuses into one mem-bound pass.
    # TODO(synk): the remaining f32 canvas round trip (~1.3x image) could be cut
    # further by emitting bf16 or fusing this epilogue into the matmul kernel.
    canvas = canvas_flat.reshape(B, hs1, ws1, C, rate, rate).transpose(0, 3, 1, 4, 2, 5)
    canvas = canvas.reshape(B, C, H + rate, W + rate)
    y = canvas[:, :, pad:pad + H, pad:pad + W] * 0.25
    return x + y * alpha


# ---------------------------------------------------------------------------
# Independent loop-based f64 numpy reference (mirrors the PyTorch forward).
# ---------------------------------------------------------------------------
def _reference_numpy(x, scores, alpha):
    B, C, H, W = x.shape
    hw = scores.shape[2]
    hs = ws = int(round(math.sqrt(hw)))
    rate = H // hs
    vk = 2 * rate
    pad = rate // 2
    xp = np.pad(x, ((0, 0), (0, 0), (pad, pad), (pad, pad)), mode="edge")
    val = np.zeros((B, hs * ws, C, vk, vk), np.float64)
    for ph in range(hs):
        for pw in range(ws):
            val[:, ph * ws + pw] = xp[:, :, ph * rate:ph * rate + vk, pw * rate:pw * rate + vk]
    yfull = np.zeros((B, C, H + rate, W + rate), np.float64)
    for b in range(B):
        for i in range(hs):
            for j in range(ws):
                wij = np.einsum("p,pckl->ckl", scores[b, i * ws + j], val[b])
                yfull[b, :, i * rate:i * rate + vk, j * rate:j * rate + vk] += wij
    y = yfull[:, :, pad:pad + H, pad:pad + W] / 4.0
    return x + y * alpha


if __name__ == "__main__":
    key = jax.random.PRNGKey(0)
    kx, ks = jax.random.split(key)
    B, C, H, W = 2, 4, 16, 16
    hs = ws = 8                       # -> rate = 2, vksize = 4, vpadding = 1
    hw = hs * ws

    x = jax.random.normal(kx, (B, C, H, W), jnp.float32)
    scores = jax.nn.softmax(jax.random.normal(ks, (B, hw, hw), jnp.float32), axis=-1)
    alpha = jnp.float32(0.5)

    out = group_conv_attention(x, scores, alpha)
    out = jax.block_until_ready(out)

    ref = _reference_numpy(np.asarray(x, np.float64), np.asarray(scores, np.float64), float(alpha))
    assert out.shape == (B, C, H, W)
    # bf16 MXU operands (f32 accumulate) vs an exact f64 reference.
    np.testing.assert_allclose(np.asarray(out, np.float64), ref, rtol=5e-3, atol=5e-3)
    print("KERNEL_OK")
</pallas_src>

<mosaic_0001>
module attributes {stable_mosaic.version = 11 : i64} {
  func.func @_matmul_kernel(%arg0: i32, %arg1: i32, %arg2: i32, %arg3: i32, %arg4: memref<1x88x128xbf16, #tpu.memory_space<vmem>>, %arg5: memref<1x128x128xbf16, #tpu.memory_space<vmem>>, %arg6: memref<1x88x128xf32, #tpu.memory_space<vmem>>) attributes {dimension_semantics = [#tpu.dimension_semantics<parallel>, #tpu.dimension_semantics<parallel>, #tpu.dimension_semantics<parallel>, #tpu.dimension_semantics<arbitrary>], iteration_bounds = array<i64: 2, 1, 1, 1>, scalar_prefetch = 0 : i64, scratch_operands = 0 : i64, tpu.core_type = #tpu.core_type<tc>, window_params = [{transform_indices = @transform_0, window_bounds = array<i64: 1, 88, 128>}, {transform_indices = @transform_1, window_bounds = array<i64: 1, 128, 128>}, {transform_indices = @transform_2, window_bounds = array<i64: 1, 88, 128>}]} {
    %c0 = arith.constant 0 : index
    %c0_0 = arith.constant 0 : index
    %c0_1 = arith.constant 0 : index
    %0 = vector.load %arg4[%c0, %c0_0, %c0_1] : memref<1x88x128xbf16, #tpu.memory_space<vmem>>, vector<1x88x128xbf16>
    %c0_2 = arith.constant 0 : index
    %c0_3 = arith.constant 0 : index
    %c0_4 = arith.constant 0 : index
    %1 = vector.load %arg5[%c0_2, %c0_3, %c0_4] : memref<1x128x128xbf16, #tpu.memory_space<vmem>>, vector<1x128x128xbf16>
    "tpu.trace_start"() <{level = 10 : i32, message = "bmk,bkn->bmn"}> : () -> ()
    %cst = arith.constant dense<0.000000e+00> : vector<1x88x128xf32>
    %2 = tpu.matmul %0, %1, %cst {dimension_numbers = #tpu.dot_dimension_numbers<[2], [1], [1], [2], [0, 0, 0, 1, 1, 2], [0], [0]>} : vector<1x88x128xbf16>, vector<1x128x128xbf16>, vector<1x88x128xf32> -> vector<1x88x128xf32>
    "tpu.trace_stop"() : () -> ()
    %c0_5 = arith.constant 0 : index
    %c0_6 = arith.constant 0 : index
    %c0_7 = arith.constant 0 : index
    %3 = vector.load %arg6[%c0_5, %c0_6, %c0_7] : memref<1x88x128xf32, #tpu.memory_space<vmem>>, vector<1x88x128xf32>
    tpu.vector_store %arg6[%c0_5, %c0_6, %c0_7], %2 {strides = array<i32>} : memref<1x88x128xf32, #tpu.memory_space<vmem>>, vector<1x88x128xf32>,
    return
  }
  func.func @transform_0(%arg0: i32, %arg1: i32, %arg2: i32, %arg3: i32) -> (i32, i32, i32) {
    %c0_i32 = arith.constant 0 : i32
    return %arg0, %arg1, %arg3 : i32, i32, i32
  }
  func.func @transform_1(%arg0: i32, %arg1: i32, %arg2: i32, %arg3: i32) -> (i32, i32, i32) {
    %c0_i32 = arith.constant 0 : i32
    return %arg0, %arg3, %arg2 : i32, i32, i32
  }
  func.func @transform_2(%arg0: i32, %arg1: i32, %arg2: i32, %arg3: i32) -> (i32, i32, i32) {
    %c0_i32 = arith.constant 0 : i32
    return %arg0, %arg1, %arg2 : i32, i32, i32
  }
}

</mosaic_0001>

<llo_original>
// kernel: group_conv_attention.1
$region0: #{group_conv_attention.1}
  #allocation0 [shape = 'u32[]', space=smem, size = 0x4, offset = 0x4, fixed_abs, tag = 'smem constant byte address 0x4 - core index']
  #allocation1 [shape = 'u32[144,128]{1,0:T(1,128)}', space=vmem, size = 0x12000, scoped, tag = 'internal scratch']
  %s0 = inlined_call_operand.vmem [shape: bf16[2,88,128], index: 0, kind: input, shape index: {}]
  %s1 = inlined_call_operand.vmem [shape: bf16[2,128,128], index: 1, kind: input, shape index: {}]
  %s2 = inlined_call_operand.vmem [shape: f32[2,88,128], index: 2, kind: output, shape index: {}]
  %s3 = sld [smem:[#allocation0]]
  $region41: #{group_conv_attention.1} parent=0
    _
  %s5 = ssub.s32 1, %s3
  %s6 = scalar_select 0, %s5, %s3
  loop: start=0, step=1, limit=4
  $region2: #{group_conv_attention.1} parent=0 // loop_pre_header
    _
  $region3: #{group_conv_attention.1} parent=0 // loop_header
    %s8 = sphi 0, %s12
    %p9 = scmp.ge.s32.totalorder %s8, 4
    %s15 = sphi 0, %s41
    %s16 = sphi 0, %s37
    %s17 = sphi 0, %s33
    %s18 = sphi 0, %s29
    %s19 = sphi 0, %s15
    %s20 = sphi 0, %s16
    %s21 = sphi 0, %s17
    %s22 = sphi 0, %s18
    %s23 = sphi 0, %s19
    %s24 = sphi 0, %s20
    %s25 = sphi 0, %s21
    %s26 = sphi 0, %s22
    %s48 = sphi 0, %s50
    %s51 = sphi 0, %s48
    %s52 = sphi 0, %s51
    %s68 = sphi 0, %s52
    %s78 = sphi 0, %s80
    %s81 = sphi 0, %s78
    %s82 = sphi 0, %s81
    %s98 = sphi 0, %s82
    %s108 = sphi 0, %s110
    %s111 = sphi 0, %s108
    %s112 = sphi 0, %s111
    %s128 = sphi 0, %s112
  $region4: #{group_conv_attention.1} parent=0 // loop_header_branch
    %11 = sbr.rel (%p9) target = $region8
  $region5: #{group_conv_attention.1} parent=0 // loop_body
    %s13 = ssub.s32 %s8, 1
    %s14 = ssub.s32 %s8, 2
    %s27 = sadd.s32 1, %s18
    %p28 = scmp.ge.s32.totalorder %s27, 1
    %s29 = scalar_select %p28, 0, %s27
    %s30 = sadd.s32 1, %s17
    %s31 = scalar_select %p28, %s30, %s17
    %p32 = scmp.ge.s32.totalorder %s31, 1
    %s33 = scalar_select %p32, 0, %s31
    %s34 = sadd.s32 1, %s16
    %s35 = scalar_select %p32, %s34, %s16
    %p36 = scmp.ge.s32.totalorder %s35, 1
    %s37 = scalar_select %p36, 0, %s35
    %s38 = sadd.s32 1, %s15
    %s39 = scalar_select %p36, %s38, %s15
    %p40 = scmp.ge.s32.totalorder %s39, 2
    %s41 = scalar_select %p40, 0, %s39
    %s42 = ssub.s32 %s15, %s41
    %s43 = ssub.s32 %s16, %s37
    %s44 = sor.u32 %s42, %s43
    %s45 = ssub.s32 %s18, %s29
    %s46 = sor.u32 %s44, %s45
    %p47 = scmp.eq.s32.totalorder %s46, 0
    %s49 = sadd.s32 %s48, 1
    %s50 = scalar_select %p47, %s48, %s49
    %p53 = pneg %p47
    %p54 = scmp.eq.s32.totalorder %s8, 1
    %p55 = por %p53, %p54
    %p56 = scmp.ne.s32.totalorder %s48, %s51
    %p57 = scmp.eq.s32.totalorder %s8, 0
    %p58 = por %p56, %p57
    %p59 = scmp.ne.s32.totalorder %s48, %s51
    %p60 = scmp.eq.s32.totalorder %s13, 1
    %p61 = por %p59, %p60
    %p62 = scmp.ne.s32.totalorder %s51, %s52
    %p63 = scmp.eq.s32.totalorder %s13, 0
    %p64 = por %p62, %p63
    %p65 = scmp.ne.s32.totalorder %s51, %s52
    %p66 = scmp.eq.s32.totalorder %s14, 1
    %p67 = por %p65, %p66
    %p69 = scmp.ne.s32.totalorder %s52, %s68
    %p70 = scmp.eq.s32.totalorder %s14, 0
    %p71 = por %p69, %p70
    %s72 = ssub.s32 %s15, %s41
    %s73 = ssub.s32 %s18, %s29
    %s74 = sor.u32 %s72, %s73
    %s75 = ssub.s32 %s17, %s33
    %s76 = sor.u32 %s74, %s75
    %p77 = scmp.eq.s32.totalorder %s76, 0
    %s79 = sadd.s32 %s78, 1
    %s80 = scalar_select %p77, %s78, %s79
    %p83 = pneg %p77
    %p84 = scmp.eq.s32.totalorder %s8, 1
    %p85 = por %p83, %p84
    %p86 = scmp.ne.s32.totalorder %s78, %s81
    %p87 = scmp.eq.s32.totalorder %s8, 0
    %p88 = por %p86, %p87
    %p89 = scmp.ne.s32.totalorder %s78, %s81
    %p90 = scmp.eq.s32.totalorder %s13, 1
    %p91 = por %p89, %p90
    %p92 = scmp.ne.s32.totalorder %s81, %s82
    %p93 = scmp.eq.s32.totalorder %s13, 0
    %p94 = por %p92, %p93
    %p95 = scmp.ne.s32.totalorder %s81, %s82
    %p96 = scmp.eq.s32.totalorder %s14, 1
    %p97 = por %p95, %p96
    %p99 = scmp.ne.s32.totalorder %s82, %s98
    %p100 = scmp.eq.s32.totalorder %s14, 0
    %p101 = por %p99, %p100
    %s102 = ssub.s32 %s15, %s41
    %s103 = ssub.s32 %s16, %s37
    %s104 = sor.u32 %s102, %s103
    %s105 = ssub.s32 %s17, %s33
    %s106 = sor.u32 %s104, %s105
    %p107 = scmp.eq.s32.totalorder %s106, 0
    %s109 = sadd.s32 %s108, 1
    %s110 = scalar_select %p107, %s108, %s109
    %p113 = pneg %p107
    %p114 = scmp.eq.s32.totalorder %s8, 1
    %p115 = por %p113, %p114
    %p116 = scmp.ne.s32.totalorder %s108, %s111
    %p117 = scmp.eq.s32.totalorder %s8, 0
    %p118 = por %p116, %p117
    %p119 = scmp.ne.s32.totalorder %s108, %s111
    %p120 = scmp.eq.s32.totalorder %s13, 1
    %p121 = por %p119, %p120
    %p122 = scmp.ne.s32.totalorder %s111, %s112
    %p123 = scmp.eq.s32.totalorder %s13, 0
    %p124 = por %p122, %p123
    %p125 = scmp.ne.s32.totalorder %s111, %s112
    %p126 = scmp.eq.s32.totalorder %s14, 1
    %p127 = por %p125, %p126
    %p129 = scmp.ne.s32.totalorder %s112, %s128
    %p130 = scmp.eq.s32.totalorder %s14, 0
    %p131 = por %p129, %p130
    %p132 = scmp.le.s32.totalorder 1, %s8
    %p133 = scmp.lt.s32.totalorder %s8, 3
    %p134 = pnand %p132, %p133
    %p135 = pneg %p134
    // Predicated region
    $region9: #{group_conv_attention.1} parent=5 // pred_check
      _
    $region10: #{group_conv_attention.1} parent=5 // pred_check_branch
      %137 = sbr.rel (%p134) target = $region12
    $region11: #{group_conv_attention.1} parent=5 // pred_region
      %s138 = ssub.s32 %s8, 1
    $region12: #{group_conv_attention.1} parent=5 // pred_fallthru
      _
    %p139 = scmp.lt.s32.totalorder %s8, 2
    // Predicated region
    $region13: #{group_conv_attention.1} parent=5 // pred_check
      %p140 = pneg %p139
    $region14: #{group_conv_attention.1} parent=5 // pred_check_branch
      %142 = sbr.rel (%p140) target = $region16
    $region15: #{group_conv_attention.1} parent=5 // pred_region
      // Predicated region
      $region17: #{group_conv_attention.1} parent=15 // pred_check
        %p143 = pneg %p58
      $region18: #{group_conv_attention.1} parent=15 // pred_check_branch
        %145 = sbr.rel (%p143) target = $region20
      $region19: #{group_conv_attention.1} parent=15 // pred_region
        %s146 = smul.u32 11, %s16
        %p147 = scmp.lt.s32.totalorder %s15, 1
        %s148 = scalar_select %p147, %s15, 1
        %p149 = scmp.lt.s32.totalorder %s146, 10
        %s150 = scalar_select %p149, %s146, 10
        %p151 = scmp.lt.s32.totalorder %s18, 0
        %s152 = scalar_select %p151, %s18, 0
        %s153 = sadd.s32 %s152, %s150
        %s154 = smul.addr %s148, 11
        %s155 = sadd.s32 %s153, %s154
        %s156 = smul.addr %s155, 4
        %s157 = scalar_lea.vmem %s0, %s156
        %s158 = smul.u32 11, %s16
      $region20: #{group_conv_attention.1} parent=15 // pred_fallthru
        _
      // Predicated region
      $region21: #{group_conv_attention.1} parent=15 // pred_check
        %p159 = pneg %p88
      $region22: #{group_conv_attention.1} parent=15 // pred_check_branch
        %161 = sbr.rel (%p159) target = $region24
      $region23: #{group_conv_attention.1} parent=15 // pred_region
        %s162 = smul.u32 16, %s18
        %p163 = scmp.lt.s32.totalorder %s15, 1
        %s164 = scalar_select %p163, %s15, 1
        %p165 = scmp.lt.s32.totalorder %s162, 15
        %s166 = scalar_select %p165, %s162, 15
        %p167 = scmp.lt.s32.totalorder %s17, 0
        %s168 = scalar_select %p167, %s17, 0
        %s169 = sadd.s32 %s168, %s166
        %s170 = smul.addr %s164, 16
        %s171 = sadd.s32 %s169, %s170
        %s172 = smul.addr %s171, 4
        %s173 = scalar_lea.vmem %s1, %s172
        %s174 = smul.u32 16, %s18
      $region24: #{group_conv_attention.1} parent=15 // pred_fallthru
        _
    $region16: #{group_conv_attention.1} parent=5 // pred_fallthru
      _
    %p175 = scmp.le.s32.totalorder 1, %s8
    %p176 = scmp.lt.s32.totalorder %s8, 3
    %p177 = pnand %p175, %p176
    %p178 = pneg %p177
    // Predicated region
    $region25: #{group_conv_attention.1} parent=5 // pred_check
      _
    $region26: #{group_conv_attention.1} parent=5 // pred_check_branch
      %180 = sbr.rel (%p177) target = $region28
    $region27: #{group_conv_attention.1} parent=5 // pred_region
      %s181 = ssub.s32 %s8, 1
      %s182 = smul.u32 11, %s20
      %p183 = scmp.lt.s32.totalorder %s19, 1
      %s184 = scalar_select %p183, %s19, 1
      %p185 = scmp.lt.s32.totalorder %s182, 10
      %s186 = scalar_select %p185, %s182, 10
      %p187 = scmp.lt.s32.totalorder %s22, 0
      %s188 = scalar_select %p187, %s22, 0
      %s189 = sadd.s32 %s188, %s186
      %s190 = smul.addr %s184, 11
      %s191 = sadd.s32 %s189, %s190
      %s192 = smul.addr %s191, 4
      %s193 = scalar_lea.vmem %s0, %s192
      %p194 = pneg %p64
      %p195 = pneg %p61
      %s196 = smul.u32 16, %s22
      %p197 = scmp.lt.s32.totalorder %s19, 1
      %s198 = scalar_select %p197, %s19, 1
      %p199 = scmp.lt.s32.totalorder %s196, 15
      %s200 = scalar_select %p199, %s196, 15
      %p201 = scmp.lt.s32.totalorder %s21, 0
      %s202 = scalar_select %p201, %s21, 0
      %s203 = sadd.s32 %s202, %s200
      %s204 = smul.addr %s198, 16
      %s205 = sadd.s32 %s203, %s204
      %s206 = smul.addr %s205, 4
      %s207 = scalar_lea.vmem %s1, %s206
      %p208 = pneg %p94
      %p209 = pneg %p91
      %p210 = pneg %p124
      %p211 = pneg %p121
      %s212 = smul.u32 11, %s20
      %p213 = scmp.lt.s32.totalorder %s19, 1
      %s214 = scalar_select %p213, %s19, 1
      %p215 = scmp.lt.s32.totalorder %s212, 10
      %s216 = scalar_select %p215, %s212, 10
      %p217 = scmp.lt.s32.totalorder %s21, 0
      %s218 = scalar_select %p217, %s21, 0
      %s219 = sadd.s32 %s218, %s216
      %s220 = smul.addr %s214, 11
      %s221 = sadd.s32 %s219, %s220
      %s222 = smul.addr %s221, 8
      %s223 = scalar_lea.vmem %s2, %s222
      %s224 = smul.u32 11, %s20
      %p225 = scmp.lt.s32.totalorder %s19, 1
      %s226 = scalar_select %p225, %s19, 1
      %p227 = scmp.lt.s32.totalorder %s224, 10
      %s228 = scalar_select %p227, %s224, 10
      %p229 = scmp.lt.s32.totalorder %s22, 0
      %s230 = scalar_select %p229, %s22, 0
      %s231 = sadd.s32 %s230, %s228
      %s232 = smul.addr %s226, 11
      %s233 = sadd.s32 %s231, %s232
      %s234 = smul.addr %s233, 4
      %s235 = scalar_lea.vmem %s0, %s234
      %s236 = smul.u32 11, %s20
      %s237 = smul.u32 16, %s22
      %p238 = scmp.lt.s32.totalorder %s19, 1
      %s239 = scalar_select %p238, %s19, 1
      %p240 = scmp.lt.s32.totalorder %s237, 15
      %s241 = scalar_select %p240, %s237, 15
      %p242 = scmp.lt.s32.totalorder %s21, 0
      %s243 = scalar_select %p242, %s21, 0
      %s244 = sadd.s32 %s243, %s241
      %s245 = smul.addr %s239, 16
      %s246 = sadd.s32 %s244, %s245
      %s247 = smul.addr %s246, 4
      %s248 = scalar_lea.vmem %s1, %s247
      %s249 = smul.u32 16, %s22
      %s250 = smul.u32 11, %s20
      %p251 = scmp.lt.s32.totalorder %s19, 1
      %s252 = scalar_select %p251, %s19, 1
      %p253 = scmp.lt.s32.totalorder %s250, 10
      %s254 = scalar_select %p253, %s250, 10
      %p255 = scmp.lt.s32.totalorder %s21, 0
      %s256 = scalar_select %p255, %s21, 0
      %s257 = sadd.s32 %s256, %s254
      %s258 = smul.addr %s252, 11
      %s259 = sadd.s32 %s257, %s258
      %s260 = smul.addr %s259, 8
      %s261 = scalar_lea.vmem %s2, %s260
      %s262 = smul.u32 11, %s20
      %v264 = vld [vmem:[%s235] sm:$0xf]
      %v265 = vld [vmem:[%s235 + $0x4] sm:$0xf]
      %v266 = vld [vmem:[%s235 + $0x8] sm:$0xf]
      %v267 = vld [vmem:[%s235 + $0xc] sm:$0xf]
      %v268 = vld [vmem:[%s235 + $0x10] sm:$0xf]
      %v269 = vld [vmem:[%s235 + $0x14] sm:$0xf]
      %v270 = vld [vmem:[%s235 + $0x18] sm:$0xf]
      %v271 = vld [vmem:[%s235 + $0x1c] sm:$0xf]
      %v272 = vld [vmem:[%s235 + $0x20] sm:$0xf]
      %v273 = vld [vmem:[%s235 + $0x24] sm:$0xf]
      %v274 = vld [vmem:[%s235 + $0x28] sm:$0xf]
      %v275 = vld [vmem:[%s248] sm:$0xf]
      %v276 = vld [vmem:[%s248 + $0x4] sm:$0xf]
      %v277 = vld [vmem:[%s248 + $0x8] sm:$0xf]
      %v278 = vld [vmem:[%s248 + $0xc] sm:$0xf]
      %v279 = vld [vmem:[%s248 + $0x10] sm:$0xf]
      %v280 = vld [vmem:[%s248 + $0x14] sm:$0xf]
      %v281 = vld [vmem:[%s248 + $0x18] sm:$0xf]
      %v282 = vld [vmem:[%s248 + $0x1c] sm:$0xf]
      %v283 = vld [vmem:[%s248 + $0x20] sm:$0xf]
      %v284 = vld [vmem:[%s248 + $0x24] sm:$0xf]
      %v285 = vld [vmem:[%s248 + $0x28] sm:$0xf]
      %v286 = vld [vmem:[%s248 + $0x2c] sm:$0xf]
      %v287 = vld [vmem:[%s248 + $0x30] sm:$0xf]
      %v288 = vld [vmem:[%s248 + $0x34] sm:$0xf]
      %v289 = vld [vmem:[%s248 + $0x38] sm:$0xf]
      %v290 = vld [vmem:[%s248 + $0x3c] sm:$0xf]
      %v302 = vunpack.c.l.b16 %v264
      %v303 = vunpack.c.l.b16 %v265
      %v304 = vunpack.c.l.b16 %v266
      %v305 = vunpack.c.l.b16 %v267
      %v306 = vunpack.c.l.b16 %v268
      %v307 = vunpack.c.l.b16 %v269
      %v308 = vunpack.c.l.b16 %v270
      %v309 = vunpack.c.l.b16 %v271
      %v310 = vunpack.c.l.b16 %v272
      %v311 = vunpack.c.l.b16 %v273
      %v312 = vunpack.c.l.b16 %v274
      %v313 = vpack.c.b16 %v303, %v302
      %v314 = vpack.c.b16 %v305, %v304
      %v315 = vpack.c.b16 %v307, %v306
      %v316 = vpack.c.b16 %v309, %v308
      %v317 = vpack.c.b16 %v311, %v310
      %v318 = vpack.c.b16 %v312, %v312
      %v341 = vunpack.c.l.b16 %v275
      %v342 = vunpack.c.l.b16 %v276
      %v343 = vunpack.c.l.b16 %v277
      %v344 = vunpack.c.l.b16 %v278
      %v345 = vunpack.c.l.b16 %v279
      %v346 = vunpack.c.l.b16 %v280
      %v347 = vunpack.c.l.b16 %v281
      %v348 = vunpack.c.l.b16 %v282
      %v349 = vunpack.c.l.b16 %v283
      %v350 = vunpack.c.l.b16 %v284
      %v351 = vunpack.c.l.b16 %v285
      %v352 = vunpack.c.l.b16 %v286
      %v353 = vunpack.c.l.b16 %v287
      %v354 = vunpack.c.l.b16 %v288
      %v355 = vunpack.c.l.b16 %v289
      %v356 = vunpack.c.l.b16 %v290
      %v357 = vpack.c.b16 %v342, %v341
      %v358 = vpack.c.b16 %v344, %v343
      %v359 = vpack.c.b16 %v346, %v345
      %v360 = vpack.c.b16 %v348, %v347
      %v361 = vpack.c.b16 %v350, %v349
      %v362 = vpack.c.b16 %v352, %v351
      %v363 = vpack.c.b16 %v354, %v353
      %v364 = vpack.c.b16 %v356, %v355
      %373 = vmatprep.subr.bf16.mxu0 0
      %374 = vmatpush1.bf16.msra.mxu0 %v357
      %375 = vmatprep.subr.bf16.mxu0 0
      %376 = vmatpush1.bf16.msra.mxu0 %v358
      %377 = vmatprep.subr.bf16.mxu0 0
      %378 = vmatpush1.bf16.msra.mxu0 %v359
      %379 = vmatprep.subr.bf16.mxu0 0
      %380 = vmatpush1.bf16.msra.mxu0 %v360
      %381 = vmatprep.subr.bf16.mxu0 0
      %382 = vmatpush1.bf16.msra.mxu0 %v361
      %383 = vmatprep.subr.bf16.mxu0 0
      %384 = vmatpush1.bf16.msra.mxu0 %v362
      %385 = vmatprep.subr.bf16.mxu0 0
      %386 = vmatpush1.bf16.msra.mxu0 %v363
      %387 = vmatprep.subr.bf16.mxu0 0
      %388 = vmatpush1.bf16.msra.mxu0 %v364
      %389 = vmatprep.subr.bf16.mxu0 0
      %390 = vmatpush1.bf16.msra.mxu0 0
      %391 = vmatprep.subr.bf16.mxu0 0
      %392 = vmatpush1.bf16.msra.mxu0 0
      %393 = vmatprep.subr.bf16.mxu0 0
      %394 = vmatpush1.bf16.msra.mxu0 0
      %395 = vmatprep.subr.bf16.mxu0 0
      %396 = vmatpush1.bf16.msra.mxu0 0
      %397 = vmatprep.subr.bf16.mxu0 0
      %398 = vmatpush1.bf16.msra.mxu0 0
      %399 = vmatprep.subr.bf16.mxu0 0
      %400 = vmatpush1.bf16.msra.mxu0 0
      %401 = vmatprep.subr.bf16.mxu0 0
      %402 = vmatpush1.bf16.msra.mxu0 0
      %403 = vmatprep.subr.bf16.mxu0 0
      %404 = vmatpush1.bf16.msra.mxu0 0
      %405 = vmatprep.mubr.bf16.mxu0 0
      %406 = vmatmul.mubr.bf16.gmra.mrb[0].mxu0 %v313
      %v407 = vpop.f32.mrb[0].mxu0
      %v408 = vadd.f32 0.0, %v407
      %v409 = vpop.f32.mrb[0].mxu0
      %v410 = vpop.f32.mrb[0].mxu0
      %v411 = vadd.f32 0.0, %v410
      %v412 = vpop.f32.mrb[0].mxu0
      %413 = vmatprep.mubr.bf16.mxu0 0
      %414 = vmatmul.mubr.bf16.gmra.mrb[0].mxu0 %v314
      %v415 = vpop.f32.mrb[0].mxu0
      %v416 = vadd.f32 0.0, %v415
      %v417 = vpop.f32.mrb[0].mxu0
      %v418 = vpop.f32.mrb[0].mxu0
      %v419 = vadd.f32 0.0, %v418
      %v420 = vpop.f32.mrb[0].mxu0
      %421 = vmatprep.mubr.bf16.mxu0 0
      %422 = vmatmul.mubr.bf16.gmra.mrb[0].mxu0 %v315
      %v423 = vpop.f32.mrb[0].mxu0
      %v424 = vadd.f32 0.0, %v423
      %v425 = vpop.f32.mrb[0].mxu0
      %v426 = vpop.f32.mrb[0].mxu0
      %v427 = vadd.f32 0.0, %v426
      %v428 = vpop.f32.mrb[0].mxu0
      %429 = vmatprep.mubr.bf16.mxu0 0
      %430 = vmatmul.mubr.bf16.gmra.mrb[0].mxu0 %v316
      %v431 = vpop.f32.mrb[0].mxu0
      %v432 = vadd.f32 0.0, %v431
      %v433 = vpop.f32.mrb[0].mxu0
      %v434 = vpop.f32.mrb[0].mxu0
      %v435 = vadd.f32 0.0, %v434
      %v436 = vpop.f32.mrb[0].mxu0
      %437 = vmatprep.mubr.bf16.mxu0 0
      %438 = vmatmul.mubr.bf16.gmra.mrb[0].mxu0 %v317
      %v439 = vpop.f32.mrb[0].mxu0
      %v440 = vadd.f32 0.0, %v439
      %v441 = vpop.f32.mrb[0].mxu0
      %v442 = vpop.f32.mrb[0].mxu0
      %v443 = vadd.f32 0.0, %v442
      %v444 = vpop.f32.mrb[0].mxu0
      %445 = vmatprep.mubr.bf16.mxu0 0
      %446 = vmatmul.mubr.bf16.gmra.mrb[0].mxu0 %v318
      %v447 = vpop.f32.mrb[0].mxu0
      %v448 = vadd.f32 0.0, %v447
      %v449 = vpop.f32.mrb[0].mxu0
      %v450 = vpop.f32.mrb[0].mxu0
      %v451 = vpop.f32.mrb[0].mxu0
      %452 = vdwg.mxu0
      %453 = vst [vmem:[%s261] sm:$0xff] %v408
      %454 = vst [vmem:[%s261 + $0x8] sm:$0xff] %v411
      %455 = vst [vmem:[%s261 + $0x10] sm:$0xff] %v416
      %456 = vst [vmem:[%s261 + $0x18] sm:$0xff] %v419
      %457 = vst [vmem:[%s261 + $0x20] sm:$0xff] %v424
      %458 = vst [vmem:[%s261 + $0x28] sm:$0xff] %v427
      %459 = vst [vmem:[%s261 + $0x30] sm:$0xff] %v432
      %460 = vst [vmem:[%s261 + $0x38] sm:$0xff] %v435
      %461 = vst [vmem:[%s261 + $0x40] sm:$0xff] %v440
      %462 = vst [vmem:[%s261 + $0x48] sm:$0xff] %v443
      %463 = vst [vmem:[%s261 + $0x50] sm:$0xff] %v448
      %s464 = smul.u32 11, %s20
      %p465 = scmp.lt.s32.totalorder %s19, 1
      %s466 = scalar_select %p465, %s19, 1
      %p467 = scmp.lt.s32.totalorder %s464, 10
      %s468 = scalar_select %p467, %s464, 10
      %p469 = scmp.lt.s32.totalorder %s21, 0
      %s470 = scalar_select %p469, %s21, 0
      %s471 = sadd.s32 %s470, %s468
      %s472 = smul.addr %s466, 11
      %s473 = sadd.s32 %s471, %s472
      %s474 = smul.addr %s473, 8
      %s475 = scalar_lea.vmem %s2, %s474
      // Predicated region
      $region29: #{group_conv_attention.1} parent=27 // pred_check
        %p476 = pneg %p121
      $region30: #{group_conv_attention.1} parent=27 // pred_check_branch
        %478 = sbr.rel (%p476) target = $region32
      $region31: #{group_conv_attention.1} parent=27 // pred_region
        %s479 = smul.u32 11, %s20
      $region32: #{group_conv_attention.1} parent=27 // pred_fallthru
        _
    $region28: #{group_conv_attention.1} parent=5 // pred_fallthru
      _
    %p480 = scmp.le.s32.totalorder 2, %s8
    // Predicated region
    $region33: #{group_conv_attention.1} parent=5 // pred_check
      %p481 = pneg %p480
    $region34: #{group_conv_attention.1} parent=5 // pred_check_branch
      %483 = sbr.rel (%p481) target = $region36
    $region35: #{group_conv_attention.1} parent=5 // pred_region
      %s484 = ssub.s32 %s8, 2
      // Predicated region
      $region37: #{group_conv_attention.1} parent=35 // pred_check
        %p485 = pneg %p127
      $region38: #{group_conv_attention.1} parent=35 // pred_check_branch
        %487 = sbr.rel (%p485) target = $region40
      $region39: #{group_conv_attention.1} parent=35 // pred_region
        %s488 = smul.u32 11, %s24
        %p489 = scmp.lt.s32.totalorder %s23, 1
        %s490 = scalar_select %p489, %s23, 1
        %p491 = scmp.lt.s32.totalorder %s488, 10
        %s492 = scalar_select %p491, %s488, 10
        %p493 = scmp.lt.s32.totalorder %s25, 0
        %s494 = scalar_select %p493, %s25, 0
        %s495 = sadd.s32 %s494, %s492
        %s496 = smul.addr %s490, 11
        %s497 = sadd.s32 %s495, %s496
        %s498 = smul.addr %s497, 8
        %s499 = scalar_lea.vmem %s2, %s498
      $region40: #{group_conv_attention.1} parent=35 // pred_fallthru
        _
    $region36: #{group_conv_attention.1} parent=5 // pred_fallthru
      _
  $region6: #{group_conv_attention.1} parent=0 // loop_footer
    %s12 = sadd.s32 1, %s8
  $region7: #{group_conv_attention.1} parent=0 // loop_footer_branch
    %7 = sbr.rel target = $region3
  $region8: #{group_conv_attention.1} parent=0 // loop_exit
    _

</llo_original>
